<compile_context>
chip_gen: v7x
topology: tpu7x:2x2x1
jax: 0.10.0
libtpu: 0.0.40
codegen_flags: <defaults>
</compile_context>

<pallas_src>
import functools

import jax
import jax.numpy as jnp
from jax.experimental import pallas as pl
from jax.experimental.pallas import tpu as pltpu

EPS = 1e-10
_NEG_BIG = float(jnp.finfo(jnp.float32).min)


def _bma_ce_kernel(logits_ref, targets_ref, loss_ref, m_sc, l_sc, t_sc,
                   *, n_classes, mask_classes):
    # logits_ref : (tb, S, tc) native dtype   (one batch tile x one class tile)
    # targets_ref: (tb, 1)     int32
    # loss_ref   : (1, 1, tb)  float32        (lane-dense per-example NLL)
    # m_sc/l_sc/t_sc : (tb, S) float32 scratch
    #   m_sc: running max, l_sc: running sum-exp, t_sc: running exp(target - m)
    c = pl.program_id(1)

    @pl.when(c == 0)
    def _init():
        m_sc[...] = jnp.full_like(m_sc, -jnp.inf)
        l_sc[...] = jnp.zeros_like(l_sc)
        t_sc[...] = jnp.zeros_like(t_sc)

    x = logits_ref[...].astype(jnp.float32)                   # (tb, S, tc)
    tb, _, tc = x.shape

    # global class index of each lane in this tile
    col = jax.lax.broadcasted_iota(jnp.int32, (tb, tc), 1) + c * tc   # (tb, tc)
    if mask_classes:
        # ragged last class tile: OOB lanes hold unspecified data -> mask before
        # the max and the exp/sum.
        x = jnp.where((col < n_classes)[:, None, :], x, _NEG_BIG)

    # --- online logsumexp over the class axis --------------------------------
    m_old = m_sc[...]
    m_new = jnp.maximum(m_old, jnp.max(x, axis=-1))           # (tb, S)
    alpha = jnp.exp(m_old - m_new)                            # (tb, S)
    e = jnp.exp(x - m_new[:, :, None])                        # (tb, S, tc)
    l_sc[...] = l_sc[...] * alpha + jnp.sum(e, axis=-1)

    # --- accumulate exp(target_logit - m) by reusing e (compare + select) ----
    onehot = col == targets_ref[...]                          # (tb, tc) bool
    t_sc[...] = t_sc[...] * alpha + jnp.sum(
        jnp.where(onehot[:, None, :], e, 0.0), axis=-1)       # (tb, S)
    m_sc[...] = m_new

    # --- finalize: BMA over samples, NLL, lane-dense store -------------------
    @pl.when(c == pl.num_programs(1) - 1)
    def _finalize():
        p_t = t_sc[...] / l_sc[...]                           # (tb, S) target prob
        nll = -jnp.log(jnp.mean(p_t, axis=1) + EPS)           # (tb,)
        loss_ref[...] = nll.reshape(loss_ref.shape)


def _round_up(x: int, m: int) -> int:
    return (x + m - 1) // m * m


def _cdiv(a: int, b: int) -> int:
    return -(-a // b)


def _vmem_capacity_bytes() -> int:
    try:
        info = pltpu.get_tpu_info()
        cap = getattr(info, "vmem_capacity_bytes", None)
        if cap:
            return int(cap)
    except Exception:
        pass
    return 64 * 1024 * 1024  # conservative (v7x per-TC) fallback


_VMEM_CAP = _vmem_capacity_bytes()


@functools.partial(jax.jit, static_argnames=("block_b", "block_c"))
def bma_cross_entropy_loss(logits, targets, *, block_b=None, block_c=None):
    """logits: [B, S, C] float (any float dtype), targets: [B] int -> scalar f32 loss."""
    B, S, C = logits.shape
    itemsize = jnp.dtype(logits.dtype).itemsize

    # Generation-aware tile budget: ~3/8 of physical VMEM, capped at 32 MiB
    # (v5e/v6e: 32 MiB, v7x: 24 MiB) -> double-buffered input + ~4 f32 temps.
    budget = min(_VMEM_CAP * 3 // 8, 32 * 1024 * 1024)

    # Bytes per class column of one batch tile: 2x native input (double-buffered)
    # plus ~4 full-block f32 temporaries (cast x, e, select product, broadcast m).
    def _per_col(bb):
        return bb * S * (2 * itemsize + 4 * 4)

    # --- batch tile: aim for >= 2 tiles (both v7x TensorCores), multiple of 8 ---
    if block_b is None:
        block_b = min(128, max(8, _round_up(_cdiv(B, 2), 8)))
    # co-size block_b with S so even a minimal tc=128 tile fits the budget
    while block_b > 8 and _per_col(block_b) * 128 > budget:
        block_b = max(8, _round_up(block_b // 2, 8))

    # --- class tile (contiguous last axis -> long DMA bursts) -------------------
    tc_cap = max(128, (budget // _per_col(block_b)) // 128 * 128)
    if block_c is not None:
        tc_cap = block_c
    if C <= tc_cap:
        tc = C                                  # single class tile
    else:
        tc = _round_up(_cdiv(C, _cdiv(C, tc_cap)), 128)   # balanced, 128-aligned

    n_b = _cdiv(B, block_b)
    n_c = _cdiv(C, tc)
    mask_classes = (C % tc) != 0                # only the ragged last tile needs it

    t = targets.astype(jnp.int32).reshape(B, 1)

    kernel = functools.partial(_bma_ce_kernel, n_classes=C, mask_classes=mask_classes)

    vmem_limit = max(32 * 1024 * 1024,
                     min(_VMEM_CAP, 128 * 1024 * 1024) - 4 * 1024 * 1024)

    per_example = pl.pallas_call(
        kernel,
        out_shape=jax.ShapeDtypeStruct((n_b, 1, block_b), jnp.float32),
        grid_spec=pltpu.PrefetchScalarGridSpec(
            num_scalar_prefetch=0,
            grid=(n_b, n_c),
            in_specs=[
                pl.BlockSpec((block_b, S, tc), lambda i, c: (i, 0, c)),
                pl.BlockSpec((block_b, 1), lambda i, c: (i, 0)),
            ],
            out_specs=pl.BlockSpec((1, 1, block_b), lambda i, c: (i, 0, 0)),
            scratch_shapes=[pltpu.VMEM((block_b, S), jnp.float32)] * 3,
        ),
        compiler_params=pltpu.CompilerParams(
            dimension_semantics=("parallel", "arbitrary"),
            vmem_limit_bytes=vmem_limit,
        ),
        cost_estimate=pl.CostEstimate(
            flops=6 * B * S * C,
            transcendentals=B * S * C,
            bytes_accessed=B * S * C * itemsize + 8 * B,
        ),
    )(logits, t)

    # nn.NLLLoss default reduction='mean' over the real batch entries
    # (ragged-tile rows beyond B hold garbage and are sliced off here).
    return jnp.mean(per_example.reshape(-1)[:B])


def _reference(logits, targets):
    probs = jax.nn.softmax(logits.astype(jnp.float32), axis=-1)
    log_probs = jnp.log(jnp.mean(probs, axis=1) + EPS)
    picked = jnp.take_along_axis(log_probs, targets[:, None].astype(jnp.int32), axis=-1)
    return -jnp.mean(picked)


if __name__ == "__main__":
    key = jax.random.PRNGKey(0)

    def run_case(k, B, S, C, block_c=None):
        k1, k2 = jax.random.split(k)
        logits = jax.random.normal(k1, (B, S, C), dtype=jnp.float32)
        targets = jax.random.randint(k2, (B,), 0, C, dtype=jnp.int32)
        loss = jax.block_until_ready(bma_cross_entropy_loss(logits, targets, block_c=block_c))
        ref = _reference(logits, targets)
        assert jnp.allclose(loss, ref, rtol=1e-5, atol=1e-5), (B, S, C, loss, ref)
        return loss

    keys = jax.random.split(key, 4)
    # small shape matching the module spec: [B, S, C] logits, [B] targets
    run_case(keys[0], B=2, S=8, C=32)
    # class-tiled path: 2 class tiles, ragged last class tile masked in-kernel
    run_case(keys[1], B=4, S=8, C=200, block_c=128)
    # two batch tiles (dual-TC split), exactly divisible batch
    run_case(keys[2], B=160, S=8, C=64)
    # ragged batch tile + ragged class tile together
    run_case(keys[3], B=100, S=4, C=257, block_c=128)

    print("KERNEL_OK")
</pallas_src>

<mosaic_0001>
module attributes {stable_mosaic.version = 11 : i64} {
  func.func @_bma_ce_kernel(%arg0: i32, %arg1: i32, %arg2: memref<8x8x32xf32, #tpu.memory_space<vmem>>, %arg3: memref<8x1xi32, #tpu.memory_space<vmem>>, %arg4: memref<1x1x8xf32, #tpu.memory_space<vmem>>, %arg5: memref<8x8xf32, #tpu.memory_space<vmem>>, %arg6: memref<8x8xf32, #tpu.memory_space<vmem>>, %arg7: memref<8x8xf32, #tpu.memory_space<vmem>>) attributes {dimension_semantics = [#tpu.dimension_semantics<parallel>, #tpu.dimension_semantics<arbitrary>], iteration_bounds = array<i64: 1, 1>, scalar_prefetch = 0 : i64, scratch_operands = 3 : i64, tpu.core_type = #tpu.core_type<tc>, window_params = [{transform_indices = @transform_0, window_bounds = array<i64: 8, 8, 32>}, {transform_indices = @transform_1, window_bounds = array<i64: 8, 1>}, {transform_indices = @transform_2, window_bounds = array<i64: 1, 1, 8>}]} {
    %c0_i32 = arith.constant 0 : i32
    %0 = arith.cmpi eq, %arg1, %c0_i32 : i32
    %1 = arith.extui %0 : i1 to i32
    %c0_i32_0 = arith.constant 0 : i32
    %2 = arith.cmpi ne, %1, %c0_i32_0 : i32
    scf.if %2 {
      %cst_22 = arith.constant 0xFF800000 : f32
      %39 = vector.broadcast %cst_22 : f32 to vector<8x8xf32>
      %c0_23 = arith.constant 0 : index
      %c0_24 = arith.constant 0 : index
      %40 = vector.load %arg5[%c0_23, %c0_24] : memref<8x8xf32, #tpu.memory_space<vmem>>, vector<8x8xf32>
      tpu.vector_store %arg5[%c0_23, %c0_24], %39 {strides = array<i32>} : memref<8x8xf32, #tpu.memory_space<vmem>>, vector<8x8xf32>,
      %cst_25 = arith.constant 0.000000e+00 : f32
      %41 = vector.broadcast %cst_25 : f32 to vector<8x8xf32>
      %c0_26 = arith.constant 0 : index
      %c0_27 = arith.constant 0 : index
      %42 = vector.load %arg6[%c0_26, %c0_27] : memref<8x8xf32, #tpu.memory_space<vmem>>, vector<8x8xf32>
      tpu.vector_store %arg6[%c0_26, %c0_27], %41 {strides = array<i32>} : memref<8x8xf32, #tpu.memory_space<vmem>>, vector<8x8xf32>,
      %cst_28 = arith.constant 0.000000e+00 : f32
      %43 = vector.broadcast %cst_28 : f32 to vector<8x8xf32>
      %c0_29 = arith.constant 0 : index
      %c0_30 = arith.constant 0 : index
      %44 = vector.load %arg7[%c0_29, %c0_30] : memref<8x8xf32, #tpu.memory_space<vmem>>, vector<8x8xf32>
      tpu.vector_store %arg7[%c0_29, %c0_30], %43 {strides = array<i32>} : memref<8x8xf32, #tpu.memory_space<vmem>>, vector<8x8xf32>,
    } else {
    }
    %c0 = arith.constant 0 : index
    %c0_1 = arith.constant 0 : index
    %c0_2 = arith.constant 0 : index
    %3 = vector.load %arg2[%c0, %c0_1, %c0_2] : memref<8x8x32xf32, #tpu.memory_space<vmem>>, vector<8x8x32xf32>
    %4 = tpu.iota {dimensions = array<i32: 1>} : vector<8x32xi32>
    %c32_i32 = arith.constant 32 : i32
    %5 = arith.muli %arg1, %c32_i32 : i32
    %6 = vector.broadcast %5 : i32 to vector<8x32xi32>
    %7 = arith.addi %4, %6 : vector<8x32xi32>
    %c0_3 = arith.constant 0 : index
    %c0_4 = arith.constant 0 : index
    %8 = vector.load %arg5[%c0_3, %c0_4] : memref<8x8xf32, #tpu.memory_space<vmem>>, vector<8x8xf32>
    %cst = arith.constant dense<0xFF800000> : vector<8x8xf32>
    %9 = vector.multi_reduction <maximumf>, %3, %cst [2] : vector<8x8x32xf32> to vector<8x8xf32>
    %10 = arith.maximumf %8, %9 : vector<8x8xf32>
    %11 = arith.subf %8, %10 : vector<8x8xf32>
    %12 = math.exp %11 : vector<8x8xf32>
    %13 = vector.shape_cast %10 : vector<8x8xf32> to vector<8x8x1xf32>
    %14 = vector.broadcast %13 : vector<8x8x1xf32> to vector<8x8x32xf32>
    %15 = arith.subf %3, %14 : vector<8x8x32xf32>
    %16 = math.exp %15 : vector<8x8x32xf32>
    %c0_5 = arith.constant 0 : index
    %c0_6 = arith.constant 0 : index
    %17 = vector.load %arg6[%c0_5, %c0_6] : memref<8x8xf32, #tpu.memory_space<vmem>>, vector<8x8xf32>
    %18 = arith.mulf %17, %12 : vector<8x8xf32>
    %cst_7 = arith.constant dense<0.000000e+00> : vector<8x8xf32>
    %19 = vector.multi_reduction <add>, %16, %cst_7 [2] : vector<8x8x32xf32> to vector<8x8xf32>
    %20 = arith.addf %18, %19 : vector<8x8xf32>
    %c0_8 = arith.constant 0 : index
    %c0_9 = arith.constant 0 : index
    %21 = vector.load %arg6[%c0_8, %c0_9] : memref<8x8xf32, #tpu.memory_space<vmem>>, vector<8x8xf32>
    tpu.vector_store %arg6[%c0_8, %c0_9], %20 {strides = array<i32>} : memref<8x8xf32, #tpu.memory_space<vmem>>, vector<8x8xf32>,
    %c0_10 = arith.constant 0 : index
    %c0_11 = arith.constant 0 : index
    %22 = vector.load %arg3[%c0_10, %c0_11] : memref<8x1xi32, #tpu.memory_space<vmem>>, vector<8x1xi32>
    %23 = vector.broadcast %22 : vector<8x1xi32> to vector<8x32xi32>
    %24 = arith.cmpi eq, %7, %23 : vector<8x32xi32>
    %c0_12 = arith.constant 0 : index
    %c0_13 = arith.constant 0 : index
    %25 = vector.load %arg7[%c0_12, %c0_13] : memref<8x8xf32, #tpu.memory_space<vmem>>, vector<8x8xf32>
    %26 = arith.mulf %25, %12 : vector<8x8xf32>
    %27 = vector.shape_cast %24 : vector<8x32xi1> to vector<8x1x32xi1>
    %cst_14 = arith.constant 0.000000e+00 : f32
    %28 = vector.shape_cast %27 : vector<8x1x32xi1> to vector<8x1x32xi1>
    %29 = vector.broadcast %28 : vector<8x1x32xi1> to vector<8x8x32xi1>
    %30 = vector.broadcast %cst_14 : f32 to vector<8x8x32xf32>
    %31 = arith.select %29, %16, %30 : vector<8x8x32xi1>, vector<8x8x32xf32>
    %cst_15 = arith.constant dense<0.000000e+00> : vector<8x8xf32>
    %32 = vector.multi_reduction <add>, %31, %cst_15 [2] : vector<8x8x32xf32> to vector<8x8xf32>
    %33 = arith.addf %26, %32 : vector<8x8xf32>
    %c0_16 = arith.constant 0 : index
    %c0_17 = arith.constant 0 : index
    %34 = vector.load %arg7[%c0_16, %c0_17] : memref<8x8xf32, #tpu.memory_space<vmem>>, vector<8x8xf32>
    tpu.vector_store %arg7[%c0_16, %c0_17], %33 {strides = array<i32>} : memref<8x8xf32, #tpu.memory_space<vmem>>, vector<8x8xf32>,
    %c0_18 = arith.constant 0 : index
    %c0_19 = arith.constant 0 : index
    %35 = vector.load %arg5[%c0_18, %c0_19] : memref<8x8xf32, #tpu.memory_space<vmem>>, vector<8x8xf32>
    tpu.vector_store %arg5[%c0_18, %c0_19], %10 {strides = array<i32>} : memref<8x8xf32, #tpu.memory_space<vmem>>, vector<8x8xf32>,
    %c0_i32_20 = arith.constant 0 : i32
    %36 = arith.cmpi eq, %arg1, %c0_i32_20 : i32
    %37 = arith.extui %36 : i1 to i32
    %c0_i32_21 = arith.constant 0 : i32
    %38 = arith.cmpi ne, %37, %c0_i32_21 : i32
    scf.if %38 {
      %c0_22 = arith.constant 0 : index
      %c0_23 = arith.constant 0 : index
      %39 = vector.load %arg7[%c0_22, %c0_23] : memref<8x8xf32, #tpu.memory_space<vmem>>, vector<8x8xf32>
      %c0_24 = arith.constant 0 : index
      %c0_25 = arith.constant 0 : index
      %40 = vector.load %arg6[%c0_24, %c0_25] : memref<8x8xf32, #tpu.memory_space<vmem>>, vector<8x8xf32>
      %41 = arith.divf %39, %40 : vector<8x8xf32>
      %cst_26 = arith.constant dense<0.000000e+00> : vector<8xf32>
      %42 = vector.multi_reduction <add>, %41, %cst_26 [1] : vector<8x8xf32> to vector<8xf32>
      %cst_27 = arith.constant 8.000000e+00 : f32
      %43 = vector.broadcast %cst_27 : f32 to vector<8xf32>
      %44 = arith.divf %42, %43 : vector<8xf32>
      %cst_28 = arith.constant 1.000000e-10 : f32
      %45 = vector.broadcast %cst_28 : f32 to vector<8xf32>
      %46 = arith.addf %44, %45 : vector<8xf32>
      %47 = math.log %46 : vector<8xf32>
      %cst_29 = arith.constant 0.000000e+00 : f32
      %48 = vector.broadcast %cst_29 : f32 to vector<8xf32>
      %49 = arith.subf %48, %47 : vector<8xf32>
      %50 = vector.shape_cast %49 : vector<8xf32> to vector<1x1x8xf32>
      %c0_30 = arith.constant 0 : index
      %c0_31 = arith.constant 0 : index
      %c0_32 = arith.constant 0 : index
      %51 = vector.load %arg4[%c0_30, %c0_31, %c0_32] : memref<1x1x8xf32, #tpu.memory_space<vmem>>, vector<1x1x8xf32>
      tpu.vector_store %arg4[%c0_30, %c0_31, %c0_32], %50 {strides = array<i32>} : memref<1x1x8xf32, #tpu.memory_space<vmem>>, vector<1x1x8xf32>,
    } else {
    }
    return
  }
  func.func @transform_0(%arg0: i32, %arg1: i32) -> (i32, i32, i32) {
    %c0_i32 = arith.constant 0 : i32
    %c0_i32_0 = arith.constant 0 : i32
    return %arg0, %c0_i32, %arg1 : i32, i32, i32
  }
  func.func @transform_1(%arg0: i32, %arg1: i32) -> (i32, i32) {
    %c0_i32 = arith.constant 0 : i32
    %c0_i32_0 = arith.constant 0 : i32
    return %arg0, %c0_i32 : i32, i32
  }
  func.func @transform_2(%arg0: i32, %arg1: i32) -> (i32, i32, i32) {
    %c0_i32 = arith.constant 0 : i32
    %c0_i32_0 = arith.constant 0 : i32
    %c0_i32_1 = arith.constant 0 : i32
    return %arg0, %c0_i32, %c0_i32_0 : i32, i32, i32
  }
}

</mosaic_0001>

<llo_original>
// kernel: bma_cross_entropy_loss.1
$region0: #{bma_cross_entropy_loss.1}
  #allocation0 [shape = 'u32[]', space=smem, size = 0x4, offset = 0x4, fixed_abs, tag = 'smem constant byte address 0x4 - core index']
  #allocation1 [shape = 'u32[144,128]{1,0:T(1,128)}', space=vmem, size = 0x12000, scoped, tag = 'internal scratch']
  #allocation2 [shape = 'f32[8,8]{1,0:T(8,128)}', space=vmem, size = 0x1000, scoped, tag = 'scratch operand']
  #allocation3 [shape = 'f32[8,8]{1,0:T(8,128)}', space=vmem, size = 0x1000, scoped, tag = 'scratch operand']
  #allocation4 [shape = 'f32[8,8]{1,0:T(8,128)}', space=vmem, size = 0x1000, scoped, tag = 'scratch operand']
  %s0 = inlined_call_operand.hbm [shape: f32[2,8,32], index: 0, kind: input, shape index: {}]
  %s1 = inlined_call_operand.vmem [shape: s32[2,1], index: 1, kind: input, shape index: {}]
  %s2 = inlined_call_operand.vmem [shape: f32[1,1,8], index: 2, kind: output, shape index: {}]
  %s3 = sld [smem:[#allocation0]]
  $region30: #{bma_cross_entropy_loss.1} parent=0
    _
  %s5 = ssub.s32 1, %s3
  %s6 = scalar_select 0, %s5, %s3
  $region1: #{bma_cross_entropy_loss.1} parent=0
    #allocation5 [shape = 'u8[32768]{0}', space=vmem, size = 0x8000, scoped, tag = 'input window, operand 0, single buffered']
    #allocation6 [shape = 's32[1]{0}', space=sflag, size = 0x4, scoped, tag = 'scoped memory for bma_cross_entropy_loss.1']
    %7 = vsyncpa [#allocation6], 0
    // Predicated region
    $region2: #{bma_cross_entropy_loss.1} parent=1 // pred_check
      _
    $region3: #{bma_cross_entropy_loss.1} parent=1 // pred_check_branch
      %9 = sbr.rel (0) target = $region5
    $region4: #{bma_cross_entropy_loss.1} parent=1 // pred_region
      %s11 = ssub.s32 1024, 256
      %12 = vsyncadd [#allocation6], %s11
      %s13 = sshll.u32 [#allocation5], 4
      %s14 = int_to_ptr.vmem [resolvable:$true] %s13
      %19 = dma.hbm_to_vmem [thread:$0]  %s0, 256, %s14, [#allocation6], 128, 128, 8
    $region5: #{bma_cross_entropy_loss.1} parent=1 // pred_fallthru
      _
    // Predicated region
    $region6: #{bma_cross_entropy_loss.1} parent=1 // pred_check
      _
    $region7: #{bma_cross_entropy_loss.1} parent=1 // pred_check_branch
      %21 = sbr.rel (0) target = $region9
    $region8: #{bma_cross_entropy_loss.1} parent=1 // pred_region
      _
    $region9: #{bma_cross_entropy_loss.1} parent=1 // pred_fallthru
      _
    // Predicated region
    $region10: #{bma_cross_entropy_loss.1} parent=1 // pred_check
      _
    $region11: #{bma_cross_entropy_loss.1} parent=1 // pred_check_branch
      %23 = sbr.rel (0) target = $region13
    $region12: #{bma_cross_entropy_loss.1} parent=1 // pred_region
      %24 = dma.done [#allocation6], 1024
    $region13: #{bma_cross_entropy_loss.1} parent=1 // pred_fallthru
      _
    %p25 = scmp.eq.s32.totalorder 0, 0
    // Predicated region
    $region14: #{bma_cross_entropy_loss.1} parent=1 // pred_check
      %p26 = pneg %p25
    $region15: #{bma_cross_entropy_loss.1} parent=1 // pred_check_branch
      %28 = sbr.rel (%p26) target = $region17
    $region16: #{bma_cross_entropy_loss.1} parent=1 // pred_region
      %vm29 = vcmask 64512
      %30 = vst.msk [vmem:[#allocation2] sm:$0xff] %vm29, -inf
      %31 = vst.msk [vmem:[#allocation3] sm:$0xff] %vm29, 0.0
      %32 = vst.msk [vmem:[#allocation4] sm:$0xff] %vm29, 0.0
    $region17: #{bma_cross_entropy_loss.1} parent=1 // pred_fallthru
      _
    %v33 = vld [vmem:[#allocation5] sm:$0xff]
    %v34 = vld [vmem:[#allocation5 + $0x8] sm:$0xff]
    %v35 = vld [vmem:[#allocation5 + $0x10] sm:$0xff]
    %v36 = vld [vmem:[#allocation5 + $0x18] sm:$0xff]
    %v37 = vld [vmem:[#allocation5 + $0x20] sm:$0xff]
    %v38 = vld [vmem:[#allocation5 + $0x28] sm:$0xff]
    %v39 = vld [vmem:[#allocation5 + $0x30] sm:$0xff]
    %v40 = vld [vmem:[#allocation5 + $0x38] sm:$0xff]
    %v41 = vlaneseq
    %v42 = vand.u32 %v41, 127
    %s43 = smul.u32 0, 32
    %v44 = vstv %s43
    %v45 = vadd.s32 %v42, %v44
    %v46 = vld [vmem:[#allocation2] sm:$0xff]
    %vm47 = vcmask 261120
    %v48 = vsel %vm47, %v33, -inf
    %49 = vmax.xlane.f32.xlu0 %v48
    %v50 = vpop.xlane.xlu0 %49
    %v51 = vsel %vm47, %v34, -inf
    %52 = vmax.xlane.f32.xlu0 %v51
    %v53 = vpop.xlane.xlu0 %52
    %v54 = vsel %vm47, %v35, -inf
    %55 = vmax.xlane.f32.xlu0 %v54
    %v56 = vpop.xlane.xlu0 %55
    %v57 = vsel %vm47, %v36, -inf
    %58 = vmax.xlane.f32.xlu0 %v57
    %v59 = vpop.xlane.xlu0 %58
    %v60 = vsel %vm47, %v37, -inf
    %61 = vmax.xlane.f32.xlu0 %v60
    %v62 = vpop.xlane.xlu0 %61
    %v63 = vsel %vm47, %v38, -inf
    %64 = vmax.xlane.f32.xlu0 %v63
    %v65 = vpop.xlane.xlu0 %64
    %v66 = vsel %vm47, %v39, -inf
    %67 = vmax.xlane.f32.xlu0 %v66
    %v68 = vpop.xlane.xlu0 %67
    %v69 = vsel %vm47, %v40, -inf
    %70 = vmax.xlane.f32.xlu0 %v69
    %v71 = vpop.xlane.xlu0 %70
    %v80 = vlaneseq
    %v81 = vshrl.u32 %v80, 7
    %v82 = vsub.s32 %v42, %v81
    %v83 = vrot.slane %v50, %v82
    %v84 = vlaneseq
    %v85 = vshrl.u32 %v84, 7
    %v86 = vsub.s32 %v42, %v85
    %v87 = vrot.slane %v53, %v86
    %v88 = vlaneseq
    %v89 = vshrl.u32 %v88, 7
    %v90 = vsub.s32 %v42, %v89
    %v91 = vrot.slane %v56, %v90
    %v92 = vlaneseq
    %v93 = vshrl.u32 %v92, 7
    %v94 = vsub.s32 %v42, %v93
    %v95 = vrot.slane %v59, %v94
    %v96 = vlaneseq
    %v97 = vshrl.u32 %v96, 7
    %v98 = vsub.s32 %v42, %v97
    %v99 = vrot.slane %v62, %v98
    %v100 = vlaneseq
    %v101 = vshrl.u32 %v100, 7
    %v102 = vsub.s32 %v42, %v101
    %v103 = vrot.slane %v65, %v102
    %v104 = vlaneseq
    %v105 = vshrl.u32 %v104, 7
    %v106 = vsub.s32 %v42, %v105
    %v107 = vrot.slane %v68, %v106
    %v108 = vlaneseq
    %v109 = vshrl.u32 %v108, 7
    %v110 = vsub.s32 %v42, %v109
    %v111 = vrot.slane %v71, %v110
    %vm112 = vcmask 1041409
    %v113 = vsel %vm112, %v87, %v83
    %vm114 = vcmask 1042434
    %v115 = vsel %vm114, %v91, %v113
    %vm116 = vcmask 1043459
    %v117 = vsel %vm116, %v95, %v115
    %vm118 = vcmask 1044484
    %v119 = vsel %vm118, %v99, %v117
    %vm120 = vcmask 1045509
    %v121 = vsel %vm120, %v103, %v119
    %vm122 = vcmask 1046534
    %v123 = vsel %vm122, %v107, %v121
    %vm124 = vcmask 1047559
    %v125 = vsel %vm124, %v111, %v123
    %v127 = vmax.f32 %v46, %v125
    %v128 = vsub.f32 %v46, %v127
    %v129 = vmul.f32 %v128, 1.442695
    %v130 = vpow.pop %v129
    %v131 = vlaneseq
    %v132 = vshrl.u32 %v131, 7
    %v133 = vsub.s32 0, %v132
    %v134 = vrot.slane %v127, %v133
    %136 = vbcast.lane.b32.xlu0 %v134, 256
    %v137 = vpop.permute.xlu0 %136
    %v138 = vlaneseq
    %v139 = vshrl.u32 %v138, 7
    %v140 = vsub.s32 1, %v139
    %v141 = vrot.slane %v127, %v140
    %143 = vbcast.lane.b32.xlu0 %v141, 256
    %v144 = vpop.permute.xlu0 %143
    %v145 = vlaneseq
    %v146 = vshrl.u32 %v145, 7
    %v147 = vsub.s32 2, %v146
    %v148 = vrot.slane %v127, %v147
    %150 = vbcast.lane.b32.xlu0 %v148, 256
    %v151 = vpop.permute.xlu0 %150
    %v152 = vlaneseq
    %v153 = vshrl.u32 %v152, 7
    %v154 = vsub.s32 3, %v153
    %v155 = vrot.slane %v127, %v154
    %157 = vbcast.lane.b32.xlu0 %v155, 256
    %v158 = vpop.permute.xlu0 %157
    %v159 = vlaneseq
    %v160 = vshrl.u32 %v159, 7
    %v161 = vsub.s32 4, %v160
    %v162 = vrot.slane %v127, %v161
    %164 = vbcast.lane.b32.xlu0 %v162, 256
    %v165 = vpop.permute.xlu0 %164
    %v166 = vlaneseq
    %v167 = vshrl.u32 %v166, 7
    %v168 = vsub.s32 5, %v167
    %v169 = vrot.slane %v127, %v168
    %171 = vbcast.lane.b32.xlu0 %v169, 256
    %v172 = vpop.permute.xlu0 %171
    %v173 = vlaneseq
    %v174 = vshrl.u32 %v173, 7
    %v175 = vsub.s32 6, %v174
    %v176 = vrot.slane %v127, %v175
    %178 = vbcast.lane.b32.xlu0 %v176, 256
    %v179 = vpop.permute.xlu0 %178
    %v180 = vlaneseq
    %v181 = vshrl.u32 %v180, 7
    %v182 = vsub.s32 7, %v181
    %v183 = vrot.slane %v127, %v182
    %185 = vbcast.lane.b32.xlu0 %v183, 256
    %v186 = vpop.permute.xlu0 %185
    %v187 = vsub.f32 %v33, %v137
    %v188 = vsub.f32 %v34, %v144
    %v189 = vsub.f32 %v35, %v151
    %v190 = vsub.f32 %v36, %v158
    %v191 = vsub.f32 %v37, %v165
    %v192 = vsub.f32 %v38, %v172
    %v193 = vsub.f32 %v39, %v179
    %v194 = vsub.f32 %v40, %v186
    %v195 = vmul.f32 %v187, 1.442695
    %v196 = vpow.pop %v195
    %v197 = vmul.f32 %v188, 1.442695
    %v198 = vpow.pop %v197
    %v199 = vmul.f32 %v189, 1.442695
    %v200 = vpow.pop %v199
    %v201 = vmul.f32 %v190, 1.442695
    %v202 = vpow.pop %v201
    %v203 = vmul.f32 %v191, 1.442695
    %v204 = vpow.pop %v203
    %v205 = vmul.f32 %v192, 1.442695
    %v206 = vpow.pop %v205
    %v207 = vmul.f32 %v193, 1.442695
    %v208 = vpow.pop %v207
    %v209 = vmul.f32 %v194, 1.442695
    %v210 = vpow.pop %v209
    %v211 = vld [vmem:[#allocation3] sm:$0xff]
    %v212 = vmul.f32 %v211, %v130
    %v213 = vsel %vm47, %v196, 0.0
    %214 = vadd.xlane.f32.xlu0 %v213
    %v215 = vpop.xlane.xlu0 %214
    %v216 = vsel %vm47, %v198, 0.0
    %217 = vadd.xlane.f32.xlu0 %v216
    %v218 = vpop.xlane.xlu0 %217
    %v219 = vsel %vm47, %v200, 0.0
    %220 = vadd.xlane.f32.xlu0 %v219
    %v221 = vpop.xlane.xlu0 %220
    %v222 = vsel %vm47, %v202, 0.0
    %223 = vadd.xlane.f32.xlu0 %v222
    %v224 = vpop.xlane.xlu0 %223
    %v225 = vsel %vm47, %v204, 0.0
    %226 = vadd.xlane.f32.xlu0 %v225
    %v227 = vpop.xlane.xlu0 %226
    %v228 = vsel %vm47, %v206, 0.0
    %229 = vadd.xlane.f32.xlu0 %v228
    %v230 = vpop.xlane.xlu0 %229
    %v231 = vsel %vm47, %v208, 0.0
    %232 = vadd.xlane.f32.xlu0 %v231
    %v233 = vpop.xlane.xlu0 %232
    %v234 = vsel %vm47, %v210, 0.0
    %235 = vadd.xlane.f32.xlu0 %v234
    %v236 = vpop.xlane.xlu0 %235
    %v245 = vlaneseq
    %v246 = vshrl.u32 %v245, 7
    %v247 = vsub.s32 %v42, %v246
    %v248 = vrot.slane %v215, %v247
    %v249 = vlaneseq
    %v250 = vshrl.u32 %v249, 7
    %v251 = vsub.s32 %v42, %v250
    %v252 = vrot.slane %v218, %v251
    %v253 = vlaneseq
    %v254 = vshrl.u32 %v253, 7
    %v255 = vsub.s32 %v42, %v254
    %v256 = vrot.slane %v221, %v255
    %v257 = vlaneseq
    %v258 = vshrl.u32 %v257, 7
    %v259 = vsub.s32 %v42, %v258
    %v260 = vrot.slane %v224, %v259
    %v261 = vlaneseq
    %v262 = vshrl.u32 %v261, 7
    %v263 = vsub.s32 %v42, %v262
    %v264 = vrot.slane %v227, %v263
    %v265 = vlaneseq
    %v266 = vshrl.u32 %v265, 7
    %v267 = vsub.s32 %v42, %v266
    %v268 = vrot.slane %v230, %v267
    %v269 = vlaneseq
    %v270 = vshrl.u32 %v269, 7
    %v271 = vsub.s32 %v42, %v270
    %v272 = vrot.slane %v233, %v271
    %v273 = vlaneseq
    %v274 = vshrl.u32 %v273, 7
    %v275 = vsub.s32 %v42, %v274
    %v276 = vrot.slane %v236, %v275
    %v277 = vsel %vm112, %v252, %v248
    %v278 = vsel %vm114, %v256, %v277
    %v279 = vsel %vm116, %v260, %v278
    %v280 = vsel %vm118, %v264, %v279
    %v281 = vsel %vm120, %v268, %v280
    %v282 = vsel %vm122, %v272, %v281
    %v283 = vsel %vm124, %v276, %v282
    %v285 = vadd.f32 %v212, %v283
    %vm286 = vcmask 64512
    %287 = vst.msk [vmem:[#allocation3] sm:$0xff] %vm286, %v285
    %v288 = vld [vmem:[%s1] sm:$0xff]
    %289 = vset.pattern.permute.xlu0 0
    %290 = vperm.xlu0 %289, %v288
    %v291 = vpop.permute.xlu0 %290
    %vm292 = vcmp.eq.s32.totalorder %v45, %v291
    %v293 = vld [vmem:[#allocation4] sm:$0xff]
    %v294 = vmul.f32 %v293, %v130
    %v295 = vsel %vm292, 1, 0
    %v296 = vcombine.high %v295, %v295
    %v298 = vunpack.c.l.s4 1966171168
    %v299 = vunpack.c.0.s8 %v298
    %v300 = vlaneseq
    %v301 = vshrl.u32 %v300, 7
    %v302 = vsub.s32 %v299, %v301
    %v303 = vrot.slane %v295, %v302
    %v305 = vunpack.c.l.s4 1966171168
    %v306 = vunpack.c.0.s8 %v305
    %v307 = vlaneseq
    %v308 = vshrl.u32 %v307, 7
    %v309 = vsub.s32 %v306, %v308
    %v310 = vrot.slane %v296, %v309
    %v311 = vcombine.high %v303, %v303
    %v312 = vcombine.high %v310, %v310
    %v314 = vunpack.c.l.s4 1966171168
    %v315 = vunpack.c.0.s8 %v314
    %v316 = vlaneseq
    %v317 = vshrl.u32 %v316, 7
    %v318 = vsub.s32 %v315, %v317
    %v319 = vrot.slane %v303, %v318
    %v321 = vunpack.c.l.s4 1966171168
    %v322 = vunpack.c.0.s8 %v321
    %v323 = vlaneseq
    %v324 = vshrl.u32 %v323, 7
    %v325 = vsub.s32 %v322, %v324
    %v326 = vrot.slane %v310, %v325
    %v328 = vunpack.c.l.s4 1966171168
    %v329 = vunpack.c.0.s8 %v328
    %v330 = vlaneseq
    %v331 = vshrl.u32 %v330, 7
    %v332 = vsub.s32 %v329, %v331
    %v333 = vrot.slane %v311, %v332
    %v335 = vunpack.c.l.s4 1966171168
    %v336 = vunpack.c.0.s8 %v335
    %v337 = vlaneseq
    %v338 = vshrl.u32 %v337, 7
    %v339 = vsub.s32 %v336, %v338
    %v340 = vrot.slane %v312, %v339
    %v341 = vcombine.high %v319, %v319
    %v342 = vcombine.high %v326, %v326
    %v343 = vcombine.high %v333, %v333
    %v344 = vcombine.high %v340, %v340
    %vm345 = vcmp.ne.s32.totalorder %v319, 0
    %vm346 = vcmp.ne.s32.totalorder %v333, 0
    %vm347 = vcmp.ne.s32.totalorder %v341, 0
    %vm348 = vcmp.ne.s32.totalorder %v343, 0
    %vm349 = vcmp.ne.s32.totalorder %v326, 0
    %vm350 = vcmp.ne.s32.totalorder %v340, 0
    %vm351 = vcmp.ne.s32.totalorder %v342, 0
    %vm352 = vcmp.ne.s32.totalorder %v344, 0
    %v353 = vsel %vm345, 1, 0
    %v354 = vsel %vm346, 1, 0
    %v355 = vsel %vm347, 1, 0
    %v356 = vsel %vm348, 1, 0
    %v357 = vsel %vm349, 1, 0
    %v358 = vsel %vm350, 1, 0
    %v359 = vsel %vm351, 1, 0
    %v360 = vsel %vm352, 1, 0
    %v361 = vlaneseq
    %v362 = vshrl.u32 %v361, 7
    %v363 = vsub.s32 0, %v362
    %v364 = vrot.slane %v353, %v363
    %v365 = vlaneseq
    %v366 = vshrl.u32 %v365, 7
    %v367 = vsub.s32 0, %v366
    %v368 = vrot.slane %v354, %v367
    %v369 = vlaneseq
    %v370 = vshrl.u32 %v369, 7
    %v371 = vsub.s32 0, %v370
    %v372 = vrot.slane %v355, %v371
    %v373 = vlaneseq
    %v374 = vshrl.u32 %v373, 7
    %v375 = vsub.s32 0, %v374
    %v376 = vrot.slane %v356, %v375
    %v377 = vlaneseq
    %v378 = vshrl.u32 %v377, 7
    %v379 = vsub.s32 0, %v378
    %v380 = vrot.slane %v357, %v379
    %v381 = vlaneseq
    %v382 = vshrl.u32 %v381, 7
    %v383 = vsub.s32 0, %v382
    %v384 = vrot.slane %v358, %v383
    %v385 = vlaneseq
    %v386 = vshrl.u32 %v385, 7
    %v387 = vsub.s32 0, %v386
    %v388 = vrot.slane %v359, %v387
    %v389 = vlaneseq
    %v390 = vshrl.u32 %v389, 7
    %v391 = vsub.s32 0, %v390
    %v392 = vrot.slane %v360, %v391
    %vm393 = vcmp.eq.s32.totalorder %v364, 1
    %vm394 = vcmp.eq.s32.totalorder %v368, 1
    %vm395 = vcmp.eq.s32.totalorder %v372, 1
    %vm396 = vcmp.eq.s32.totalorder %v376, 1
    %vm397 = vcmp.eq.s32.totalorder %v380, 1
    %vm398 = vcmp.eq.s32.totalorder %v384, 1
    %vm399 = vcmp.eq.s32.totalorder %v388, 1
    %vm400 = vcmp.eq.s32.totalorder %v392, 1
    %v401 = vsel %vm393, %v196, 0.0
    %v402 = vsel %vm394, %v198, 0.0
    %v403 = vsel %vm395, %v200, 0.0
    %v404 = vsel %vm396, %v202, 0.0
    %v405 = vsel %vm397, %v204, 0.0
    %v406 = vsel %vm398, %v206, 0.0
    %v407 = vsel %vm399, %v208, 0.0
    %v408 = vsel %vm400, %v210, 0.0
    %v409 = vsel %vm47, %v401, 0.0
    %410 = vadd.xlane.f32.xlu0 %v409
    %v411 = vpop.xlane.xlu0 %410
    %v412 = vsel %vm47, %v402, 0.0
    %413 = vadd.xlane.f32.xlu0 %v412
    %v414 = vpop.xlane.xlu0 %413
    %v415 = vsel %vm47, %v403, 0.0
    %416 = vadd.xlane.f32.xlu0 %v415
    %v417 = vpop.xlane.xlu0 %416
    %v418 = vsel %vm47, %v404, 0.0
    %419 = vadd.xlane.f32.xlu0 %v418
    %v420 = vpop.xlane.xlu0 %419
    %v421 = vsel %vm47, %v405, 0.0
    %422 = vadd.xlane.f32.xlu0 %v421
    %v423 = vpop.xlane.xlu0 %422
    %v424 = vsel %vm47, %v406, 0.0
    %425 = vadd.xlane.f32.xlu0 %v424
    %v426 = vpop.xlane.xlu0 %425
    %v427 = vsel %vm47, %v407, 0.0
    %428 = vadd.xlane.f32.xlu0 %v427
    %v429 = vpop.xlane.xlu0 %428
    %v430 = vsel %vm47, %v408, 0.0
    %431 = vadd.xlane.f32.xlu0 %v430
    %v432 = vpop.xlane.xlu0 %431
    %v441 = vlaneseq
    %v442 = vshrl.u32 %v441, 7
    %v443 = vsub.s32 %v42, %v442
    %v444 = vrot.slane %v411, %v443
    %v445 = vlaneseq
    %v446 = vshrl.u32 %v445, 7
    %v447 = vsub.s32 %v42, %v446
    %v448 = vrot.slane %v414, %v447
    %v449 = vlaneseq
    %v450 = vshrl.u32 %v449, 7
    %v451 = vsub.s32 %v42, %v450
    %v452 = vrot.slane %v417, %v451
    %v453 = vlaneseq
    %v454 = vshrl.u32 %v453, 7
    %v455 = vsub.s32 %v42, %v454
    %v456 = vrot.slane %v420, %v455
    %v457 = vlaneseq
    %v458 = vshrl.u32 %v457, 7
    %v459 = vsub.s32 %v42, %v458
    %v460 = vrot.slane %v423, %v459
    %v461 = vlaneseq
    %v462 = vshrl.u32 %v461, 7
    %v463 = vsub.s32 %v42, %v462
    %v464 = vrot.slane %v426, %v463
    %v465 = vlaneseq
    %v466 = vshrl.u32 %v465, 7
    %v467 = vsub.s32 %v42, %v466
    %v468 = vrot.slane %v429, %v467
    %v469 = vlaneseq
    %v470 = vshrl.u32 %v469, 7
    %v471 = vsub.s32 %v42, %v470
    %v472 = vrot.slane %v432, %v471
    %v473 = vsel %vm112, %v448, %v444
    %v474 = vsel %vm114, %v452, %v473
    %v475 = vsel %vm116, %v456, %v474
    %v476 = vsel %vm118, %v460, %v475
    %v477 = vsel %vm120, %v464, %v476
    %v478 = vsel %vm122, %v468, %v477
    %v479 = vsel %vm124, %v472, %v478
    %v481 = vadd.f32 %v294, %v479
    %482 = vst.msk [vmem:[#allocation4] sm:$0xff] %vm286, %v481
    %483 = vst.msk [vmem:[#allocation2] sm:$0xff] %vm286, %v127
    // Predicated region
    $region18: #{bma_cross_entropy_loss.1} parent=1 // pred_check
      %p484 = pneg %p25
    $region19: #{bma_cross_entropy_loss.1} parent=1 // pred_check_branch
      %486 = sbr.rel (%p484) target = $region21
    $region20: #{bma_cross_entropy_loss.1} parent=1 // pred_region
      %v487 = vld [vmem:[#allocation4] sm:$0xff]
      %v488 = vld [vmem:[#allocation3] sm:$0xff]
      %v489 = vrcp.pop %v488
      %v490 = vmul.f32 %v487, %v489
      %v491 = vsel %vm286, %v490, 0.0
      %492 = vadd.xlane.f32.xlu0 %v491
      %v493 = vpop.xlane.xlu0 %492
      %v494 = vrcp.pop 8.0
      %v495 = vmul.f32 %v493, %v494
      %v496 = vadd.f32 %v495, 1e-10
      %v497 = vlog2.pop %v496
      %v498 = vmul.f32 %v497, 0.6931472
      %v499 = vsub.f32 0.0, %v498
      %v501 = vlaneseq
      %v502 = vshrl.u32 %v501, 7
      %v503 = vsub.s32 %v42, %v502
      %v504 = vrot.slane %v499, %v503
      %vm506 = vcmask 57344
      %507 = vst.msk [vmem:[%s2] sm:$0x1] %vm506, %v504
    $region21: #{bma_cross_entropy_loss.1} parent=1 // pred_fallthru
      _
    // Predicated region
    $region22: #{bma_cross_entropy_loss.1} parent=1 // pred_check
      _
    $region23: #{bma_cross_entropy_loss.1} parent=1 // pred_check_branch
      %509 = sbr.rel (0) target = $region25
    $region24: #{bma_cross_entropy_loss.1} parent=1 // pred_region
      _
    $region25: #{bma_cross_entropy_loss.1} parent=1 // pred_fallthru
      _
    // Predicated region
    $region26: #{bma_cross_entropy_loss.1} parent=1 // pred_check
      _
    $region27: #{bma_cross_entropy_loss.1} parent=1 // pred_check_branch
      %511 = sbr.rel (0) target = $region29
    $region28: #{bma_cross_entropy_loss.1} parent=1 // pred_region
      _
    $region29: #{bma_cross_entropy_loss.1} parent=1 // pred_fallthru
      _
    %512 = vsyncpa [#allocation6], 1

</llo_original>
